<compile_context>
chip_gen: v7x
topology: tpu7x:2x2x1
jax: 0.10.0
libtpu: 0.0.40
codegen_flags: <defaults>
</compile_context>

<pallas_src>
import jax
import jax.numpy as jnp
from jax.experimental import pallas as pl
from jax.experimental.pallas import tpu as pltpu

# ---- problem sizes (from the PyTorch module: 6 features, hidden=8, 2 layers, seq=5) ----
BATCH = 4
SEQ_LEN = 5
INPUT_SIZE = 6
HIDDEN_SIZE = 8
NUM_LAYERS = 2  # hard-wired as two explicit layers inside the kernel


def lstm_kernel(x2d_ref,
                w_ih0_ref, b0_ref, w_hh0_ref,
                w1_ref, b1_ref,
                w_fc_ref, b_fc_ref,
                out_ref):
    f32 = jnp.float32
    H = w_hh0_ref.shape[0]           # hidden size
    T = w_fc_ref.shape[0]            # sequence length
    TB = x2d_ref.shape[0]
    BP = TB // T                     # padded batch (multiple of 8 sublanes)
    B = out_ref.shape[0]             # true batch

    w_hh0 = w_hh0_ref[...]           # (H, 4H)
    w1 = w1_ref[...]                 # (2H, 4H) = [w_ih1_t ; w_hh1_t]
    wfc = w_fc_ref[...]              # (T, H)

    # Layer-0 input projection hoisted out of the recurrence (bias folded once).
    xproj = (jnp.dot(x2d_ref[...], w_ih0_ref[...], preferred_element_type=f32)
             + b0_ref[...])          # (T*BP, 4H), rows [t*BP:(t+1)*BP] == timestep t

    # Pre-broadcast the layer-1 bias once (no per-step broadcast_in_dim).
    b1b = jnp.broadcast_to(b1_ref[...], (BP, 4 * H))

    def cell(g, c_prev):
        # One sigmoid over the whole (BP,4H) tile + one tanh on the g-slice
        # (+ tanh(c)) -> 3 EUP calls per cell instead of 5.
        sg = jax.nn.sigmoid(g)
        i = sg[:, 0 * H:1 * H]
        f = sg[:, 1 * H:2 * H]
        o = sg[:, 3 * H:4 * H]
        gg = jnp.tanh(g[:, 2 * H:3 * H])
        c = f * c_prev + i * gg
        h = o * jnp.tanh(c)
        return h, c

    def cell0(t, h, c):
        g = xproj[t * BP:(t + 1) * BP, :]       # sublane-aligned static slice
        if t > 0:  # h == 0 at t == 0: skip the dead recurrent matmul
            g = g + jnp.dot(h, w_hh0, preferred_element_type=f32)
        return cell(g, c)

    def cell1(h0_in, h, c, first):
        if first:
            # h1 == 0 at its first step: only the w_ih1 half of the stacked weight matters.
            g = jnp.dot(h0_in, w1[:H, :], preferred_element_type=f32) + b1b
        else:
            # Fused ih/hh matmul; the concat is a one-vreg lane op.
            hcat = jnp.concatenate([h0_in, h], axis=-1)        # (BP, 2H)
            g = jnp.dot(hcat, w1, preferred_element_type=f32) + b1b
        return cell(g, c)

    zeros = jnp.zeros((BP, H), f32)

    # Wavefront over the two layers: at outer step t, layer-0(t) and layer-1(t-1)
    # are independent, so the unrolled trace exposes a (T+1)-cell critical path.
    h0, c0 = cell0(0, zeros, zeros)
    h0_prev = h0
    h1, c1 = zeros, zeros
    acc = jnp.zeros((BP, H), f32)            # running partial dot against w_fc

    for t in range(1, T):
        h0, c0 = cell0(t, h0, c0)                        # layer-0, timestep t
        h1, c1 = cell1(h0_prev, h1, c1, first=(t == 1))  # layer-1, timestep t-1
        acc = acc + h1 * wfc[t - 1:t, :]
        h0_prev = h0

    h1, c1 = cell1(h0_prev, h1, c1, first=(T == 1))      # layer-1, timestep T-1
    acc = acc + h1 * wfc[T - 1:T, :]

    # Epilogue on VPU/XLU only: lane-sum reduction replaces the N=1 MXU dot.
    # Only the first B (true-batch) rows are written out.
    out_ref[...] = jnp.sum(acc[:B, :], axis=-1, keepdims=True) + b_fc_ref[...]


def lstm_forward(x, params):
    """x: (B, T, F) float32 -> (B, 1) float32."""
    B, T, F = x.shape
    BP = ((B + 7) // 8) * 8   # pad batch to a full sublane group
    FP = ((F + 7) // 8) * 8   # pad features so the contraction dim is a multiple of 8
    # Layout plumbing outside the kernel: time-major, padded, flattened so the
    # kernel can do one hoisted input projection and aligned per-timestep slices.
    xt = jnp.transpose(x, (1, 0, 2))                     # (T, B, F)
    xt = jnp.pad(xt, ((0, 0), (0, BP - B), (0, FP - F)))
    x2d = xt.reshape(T * BP, FP)
    w_ih0 = jnp.pad(params["w_ih0_t"], ((0, FP - F), (0, 0)))  # (FP, 4H), zero rows for pad
    ins = [x2d,
           w_ih0, params["b0"], params["w_hh0_t"],
           params["w1_t"], params["b1"],
           params["w_fc_rows"], params["b_fc"]]
    vmem = pl.BlockSpec(memory_space=pltpu.MemorySpace.VMEM)
    return pl.pallas_call(
        lstm_kernel,
        out_shape=jax.ShapeDtypeStruct((B, 1), jnp.float32),
        in_specs=[vmem] * len(ins),
        out_specs=vmem,
    )(*ins)


def init_params(key, input_size, hidden_size, seq_len):
    """Deterministic init mimicking PyTorch's U(-1/sqrt(H), 1/sqrt(H))."""
    k = 1.0 / jnp.sqrt(jnp.float32(hidden_size))
    keys = jax.random.split(key, 11)

    def u(key, shape):
        return jax.random.uniform(key, shape, jnp.float32, -k, k)

    H = hidden_size
    # Layer 0: weight_ih (4H, F), weight_hh (4H, H), biases (4H,) each
    w_ih0 = u(keys[0], (4 * H, input_size))
    w_hh0 = u(keys[1], (4 * H, H))
    b_ih0 = u(keys[2], (4 * H,))
    b_hh0 = u(keys[3], (4 * H,))
    # Layer 1: input is H
    w_ih1 = u(keys[4], (4 * H, H))
    w_hh1 = u(keys[5], (4 * H, H))
    b_ih1 = u(keys[6], (4 * H,))
    b_hh1 = u(keys[7], (4 * H,))
    # fc: Linear(H*seq_len, 1), PyTorch uses U(-1/sqrt(in), 1/sqrt(in))
    kf = 1.0 / jnp.sqrt(jnp.float32(H * seq_len))
    w_fc = jax.random.uniform(keys[8], (1, H * seq_len), jnp.float32, -kf, kf)
    b_fc = jax.random.uniform(keys[9], (1,), jnp.float32, -kf, kf)

    w_ih1_t = w_ih1.T                                     # (H, 4H)
    w_hh1_t = w_hh1.T                                     # (H, 4H)
    return {
        # kernel params
        "w_ih0_t": w_ih0.T,                               # (F, 4H)
        "w_hh0_t": w_hh0.T,                               # (H, 4H)
        "b0": (b_ih0 + b_hh0).reshape(1, 4 * H),          # (1, 4H)
        "w1_t": jnp.concatenate([w_ih1_t, w_hh1_t], 0),   # (2H, 4H) fused layer-1 weight
        "b1": (b_ih1 + b_hh1).reshape(1, 4 * H),          # (1, 4H)
        "w_fc_rows": w_fc.reshape(seq_len, H),            # (T, H) per-timestep fc rows
        "b_fc": b_fc.reshape(1, 1),                       # (1, 1)
        # un-fused copies, used only by the pure-JAX reference
        "w_ih1_t": w_ih1_t,
        "w_hh1_t": w_hh1_t,
        "w_fc_t": w_fc.T,                                 # (T*H, 1)
    }


def reference_forward(x, p):
    """Pure-JAX reference mirroring torch.nn.LSTM(num_layers=2) + Linear."""
    B, T, F = x.shape
    H = HIDDEN_SIZE
    h0 = jnp.zeros((B, H)); c0 = jnp.zeros((B, H))
    h1 = jnp.zeros((B, H)); c1 = jnp.zeros((B, H))
    outs = []
    for t in range(T):
        xt = x[:, t, :]
        g = xt @ p["w_ih0_t"] + h0 @ p["w_hh0_t"] + p["b0"]
        i, f, gg, o = (jax.nn.sigmoid(g[:, :H]), jax.nn.sigmoid(g[:, H:2*H]),
                       jnp.tanh(g[:, 2*H:3*H]), jax.nn.sigmoid(g[:, 3*H:]))
        c0 = f * c0 + i * gg
        h0 = o * jnp.tanh(c0)
        g = h0 @ p["w_ih1_t"] + h1 @ p["w_hh1_t"] + p["b1"]
        i, f, gg, o = (jax.nn.sigmoid(g[:, :H]), jax.nn.sigmoid(g[:, H:2*H]),
                       jnp.tanh(g[:, 2*H:3*H]), jax.nn.sigmoid(g[:, 3*H:]))
        c1 = f * c1 + i * gg
        h1 = o * jnp.tanh(c1)
        outs.append(h1)
    flat = jnp.concatenate(outs, axis=-1)
    return flat @ p["w_fc_t"] + p["b_fc"]


if __name__ == "__main__":
    key = jax.random.PRNGKey(0)
    kx, kp = jax.random.split(key)
    x = jax.random.normal(kx, (BATCH, SEQ_LEN, INPUT_SIZE), jnp.float32)
    params = init_params(kp, INPUT_SIZE, HIDDEN_SIZE, SEQ_LEN)

    out = lstm_forward(x, params)
    out = jax.block_until_ready(out)

    ref = reference_forward(x, params)
    assert out.shape == (BATCH, 1), out.shape
    # Tolerance sized for MXU default-precision (bf16-pass) f32 matmuls.
    assert jnp.allclose(out, ref, rtol=2e-3, atol=2e-3), (out, ref)

    print("KERNEL_OK")
</pallas_src>

<mosaic_0001>
module attributes {stable_mosaic.version = 11 : i64} {
  func.func @lstm_kernel(%arg0: memref<40x8xf32, #tpu.memory_space<vmem>>, %arg1: memref<8x32xf32, #tpu.memory_space<vmem>>, %arg2: memref<1x32xf32, #tpu.memory_space<vmem>>, %arg3: memref<8x32xf32, #tpu.memory_space<vmem>>, %arg4: memref<16x32xf32, #tpu.memory_space<vmem>>, %arg5: memref<1x32xf32, #tpu.memory_space<vmem>>, %arg6: memref<5x8xf32, #tpu.memory_space<vmem>>, %arg7: memref<1x1xf32, #tpu.memory_space<vmem>>, %arg8: memref<4x1xf32, #tpu.memory_space<vmem>>) attributes {dimension_semantics = [], scalar_prefetch = 0 : i64, scratch_operands = 0 : i64, tpu.core_type = #tpu.core_type<tc>} {
    %c0 = arith.constant 0 : index
    %c0_0 = arith.constant 0 : index
    %0 = vector.load %arg3[%c0, %c0_0] : memref<8x32xf32, #tpu.memory_space<vmem>>, vector<8x32xf32>
    %c0_1 = arith.constant 0 : index
    %c0_2 = arith.constant 0 : index
    %1 = vector.load %arg4[%c0_1, %c0_2] : memref<16x32xf32, #tpu.memory_space<vmem>>, vector<16x32xf32>
    %c0_3 = arith.constant 0 : index
    %c0_4 = arith.constant 0 : index
    %2 = vector.load %arg6[%c0_3, %c0_4] : memref<5x8xf32, #tpu.memory_space<vmem>>, vector<5x8xf32>
    %c0_5 = arith.constant 0 : index
    %c0_6 = arith.constant 0 : index
    %3 = vector.load %arg0[%c0_5, %c0_6] : memref<40x8xf32, #tpu.memory_space<vmem>>, vector<40x8xf32>
    %c0_7 = arith.constant 0 : index
    %c0_8 = arith.constant 0 : index
    %4 = vector.load %arg1[%c0_7, %c0_8] : memref<8x32xf32, #tpu.memory_space<vmem>>, vector<8x32xf32>
    %cst = arith.constant dense<0.000000e+00> : vector<40x32xf32>
    %5 = tpu.matmul %3, %4, %cst {dimension_numbers = #tpu.dot_dimension_numbers<[1], [0], [0], [1], [0, 0, 1, 1], [], []>} : vector<40x8xf32>, vector<8x32xf32>, vector<40x32xf32> -> vector<40x32xf32>
    %c0_9 = arith.constant 0 : index
    %c0_10 = arith.constant 0 : index
    %6 = vector.load %arg2[%c0_9, %c0_10] : memref<1x32xf32, #tpu.memory_space<vmem>>, vector<1x32xf32>
    %7 = vector.broadcast %6 : vector<1x32xf32> to vector<40x32xf32>
    %8 = arith.addf %5, %7 : vector<40x32xf32>
    %c0_11 = arith.constant 0 : index
    %c0_12 = arith.constant 0 : index
    %9 = vector.load %arg5[%c0_11, %c0_12] : memref<1x32xf32, #tpu.memory_space<vmem>>, vector<1x32xf32>
    %10 = vector.shape_cast %9 : vector<1x32xf32> to vector<1x32xf32>
    %11 = vector.broadcast %10 : vector<1x32xf32> to vector<8x32xf32>
    %cst_13 = arith.constant 0.000000e+00 : f32
    %12 = vector.broadcast %cst_13 : f32 to vector<8x8xf32>
    %13 = vector.extract_strided_slice %8 {offsets = [0, 0], sizes = [8, 32], strides = [1, 1]} : vector<40x32xf32> to vector<8x32xf32>
    %14 = arith.negf %13 : vector<8x32xf32>
    %15 = math.exp %14 : vector<8x32xf32>
    %cst_14 = arith.constant 1.000000e+00 : f32
    %16 = vector.broadcast %cst_14 : f32 to vector<8x32xf32>
    %17 = arith.addf %16, %15 : vector<8x32xf32>
    %18 = arith.divf %16, %17 : vector<8x32xf32>
    %19 = vector.extract_strided_slice %18 {offsets = [0, 0], sizes = [8, 8], strides = [1, 1]} : vector<8x32xf32> to vector<8x8xf32>
    %20 = vector.extract_strided_slice %18 {offsets = [0, 8], sizes = [8, 8], strides = [1, 1]} : vector<8x32xf32> to vector<8x8xf32>
    %21 = vector.extract_strided_slice %18 {offsets = [0, 24], sizes = [8, 8], strides = [1, 1]} : vector<8x32xf32> to vector<8x8xf32>
    %22 = vector.extract_strided_slice %13 {offsets = [0, 16], sizes = [8, 8], strides = [1, 1]} : vector<8x32xf32> to vector<8x8xf32>
    %23 = math.tanh %22 : vector<8x8xf32>
    %24 = arith.mulf %20, %12 : vector<8x8xf32>
    %25 = arith.mulf %19, %23 : vector<8x8xf32>
    %26 = arith.addf %24, %25 : vector<8x8xf32>
    %27 = math.tanh %26 : vector<8x8xf32>
    %28 = arith.mulf %21, %27 : vector<8x8xf32>
    %cst_15 = arith.constant 0.000000e+00 : f32
    %29 = vector.broadcast %cst_15 : f32 to vector<8x8xf32>
    %30 = vector.extract_strided_slice %8 {offsets = [8, 0], sizes = [8, 32], strides = [1, 1]} : vector<40x32xf32> to vector<8x32xf32>
    %cst_16 = arith.constant dense<0.000000e+00> : vector<8x32xf32>
    %31 = tpu.matmul %28, %0, %cst_16 {dimension_numbers = #tpu.dot_dimension_numbers<[1], [0], [0], [1], [0, 0, 1, 1], [], []>} : vector<8x8xf32>, vector<8x32xf32>, vector<8x32xf32> -> vector<8x32xf32>
    %32 = arith.addf %30, %31 : vector<8x32xf32>
    %33 = arith.negf %32 : vector<8x32xf32>
    %34 = math.exp %33 : vector<8x32xf32>
    %cst_17 = arith.constant 1.000000e+00 : f32
    %35 = vector.broadcast %cst_17 : f32 to vector<8x32xf32>
    %36 = arith.addf %35, %34 : vector<8x32xf32>
    %37 = arith.divf %35, %36 : vector<8x32xf32>
    %38 = vector.extract_strided_slice %37 {offsets = [0, 0], sizes = [8, 8], strides = [1, 1]} : vector<8x32xf32> to vector<8x8xf32>
    %39 = vector.extract_strided_slice %37 {offsets = [0, 8], sizes = [8, 8], strides = [1, 1]} : vector<8x32xf32> to vector<8x8xf32>
    %40 = vector.extract_strided_slice %37 {offsets = [0, 24], sizes = [8, 8], strides = [1, 1]} : vector<8x32xf32> to vector<8x8xf32>
    %41 = vector.extract_strided_slice %32 {offsets = [0, 16], sizes = [8, 8], strides = [1, 1]} : vector<8x32xf32> to vector<8x8xf32>
    %42 = math.tanh %41 : vector<8x8xf32>
    %43 = arith.mulf %39, %26 : vector<8x8xf32>
    %44 = arith.mulf %38, %42 : vector<8x8xf32>
    %45 = arith.addf %43, %44 : vector<8x8xf32>
    %46 = math.tanh %45 : vector<8x8xf32>
    %47 = arith.mulf %40, %46 : vector<8x8xf32>
    %48 = vector.extract_strided_slice %1 {offsets = [0, 0], sizes = [8, 32], strides = [1, 1]} : vector<16x32xf32> to vector<8x32xf32>
    %cst_18 = arith.constant dense<0.000000e+00> : vector<8x32xf32>
    %49 = tpu.matmul %28, %48, %cst_18 {dimension_numbers = #tpu.dot_dimension_numbers<[1], [0], [0], [1], [0, 0, 1, 1], [], []>} : vector<8x8xf32>, vector<8x32xf32>, vector<8x32xf32> -> vector<8x32xf32>
    %50 = arith.addf %49, %11 : vector<8x32xf32>
    %51 = arith.negf %50 : vector<8x32xf32>
    %52 = math.exp %51 : vector<8x32xf32>
    %cst_19 = arith.constant 1.000000e+00 : f32
    %53 = vector.broadcast %cst_19 : f32 to vector<8x32xf32>
    %54 = arith.addf %53, %52 : vector<8x32xf32>
    %55 = arith.divf %53, %54 : vector<8x32xf32>
    %56 = vector.extract_strided_slice %55 {offsets = [0, 0], sizes = [8, 8], strides = [1, 1]} : vector<8x32xf32> to vector<8x8xf32>
    %57 = vector.extract_strided_slice %55 {offsets = [0, 8], sizes = [8, 8], strides = [1, 1]} : vector<8x32xf32> to vector<8x8xf32>
    %58 = vector.extract_strided_slice %55 {offsets = [0, 24], sizes = [8, 8], strides = [1, 1]} : vector<8x32xf32> to vector<8x8xf32>
    %59 = vector.extract_strided_slice %50 {offsets = [0, 16], sizes = [8, 8], strides = [1, 1]} : vector<8x32xf32> to vector<8x8xf32>
    %60 = math.tanh %59 : vector<8x8xf32>
    %61 = arith.mulf %57, %12 : vector<8x8xf32>
    %62 = arith.mulf %56, %60 : vector<8x8xf32>
    %63 = arith.addf %61, %62 : vector<8x8xf32>
    %64 = math.tanh %63 : vector<8x8xf32>
    %65 = arith.mulf %58, %64 : vector<8x8xf32>
    %66 = vector.extract_strided_slice %2 {offsets = [0, 0], sizes = [1, 8], strides = [1, 1]} : vector<5x8xf32> to vector<1x8xf32>
    %67 = vector.broadcast %66 : vector<1x8xf32> to vector<8x8xf32>
    %68 = arith.mulf %65, %67 : vector<8x8xf32>
    %69 = arith.addf %29, %68 : vector<8x8xf32>
    %70 = vector.extract_strided_slice %8 {offsets = [16, 0], sizes = [8, 32], strides = [1, 1]} : vector<40x32xf32> to vector<8x32xf32>
    %cst_20 = arith.constant dense<0.000000e+00> : vector<8x32xf32>
    %71 = tpu.matmul %47, %0, %cst_20 {dimension_numbers = #tpu.dot_dimension_numbers<[1], [0], [0], [1], [0, 0, 1, 1], [], []>} : vector<8x8xf32>, vector<8x32xf32>, vector<8x32xf32> -> vector<8x32xf32>
    %72 = arith.addf %70, %71 : vector<8x32xf32>
    %73 = arith.negf %72 : vector<8x32xf32>
    %74 = math.exp %73 : vector<8x32xf32>
    %cst_21 = arith.constant 1.000000e+00 : f32
    %75 = vector.broadcast %cst_21 : f32 to vector<8x32xf32>
    %76 = arith.addf %75, %74 : vector<8x32xf32>
    %77 = arith.divf %75, %76 : vector<8x32xf32>
    %78 = vector.extract_strided_slice %77 {offsets = [0, 0], sizes = [8, 8], strides = [1, 1]} : vector<8x32xf32> to vector<8x8xf32>
    %79 = vector.extract_strided_slice %77 {offsets = [0, 8], sizes = [8, 8], strides = [1, 1]} : vector<8x32xf32> to vector<8x8xf32>
    %80 = vector.extract_strided_slice %77 {offsets = [0, 24], sizes = [8, 8], strides = [1, 1]} : vector<8x32xf32> to vector<8x8xf32>
    %81 = vector.extract_strided_slice %72 {offsets = [0, 16], sizes = [8, 8], strides = [1, 1]} : vector<8x32xf32> to vector<8x8xf32>
    %82 = math.tanh %81 : vector<8x8xf32>
    %83 = arith.mulf %79, %45 : vector<8x8xf32>
    %84 = arith.mulf %78, %82 : vector<8x8xf32>
    %85 = arith.addf %83, %84 : vector<8x8xf32>
    %86 = math.tanh %85 : vector<8x8xf32>
    %87 = arith.mulf %80, %86 : vector<8x8xf32>
    %88 = tpu.concatenate %47, %65 in 1 : vector<8x8xf32>, vector<8x8xf32> -> vector<8x16xf32>
    %cst_22 = arith.constant dense<0.000000e+00> : vector<8x32xf32>
    %89 = tpu.matmul %88, %1, %cst_22 {dimension_numbers = #tpu.dot_dimension_numbers<[1], [0], [0], [1], [0, 0, 1, 1], [], []>} : vector<8x16xf32>, vector<16x32xf32>, vector<8x32xf32> -> vector<8x32xf32>
    %90 = arith.addf %89, %11 : vector<8x32xf32>
    %91 = arith.negf %90 : vector<8x32xf32>
    %92 = math.exp %91 : vector<8x32xf32>
    %cst_23 = arith.constant 1.000000e+00 : f32
    %93 = vector.broadcast %cst_23 : f32 to vector<8x32xf32>
    %94 = arith.addf %93, %92 : vector<8x32xf32>
    %95 = arith.divf %93, %94 : vector<8x32xf32>
    %96 = vector.extract_strided_slice %95 {offsets = [0, 0], sizes = [8, 8], strides = [1, 1]} : vector<8x32xf32> to vector<8x8xf32>
    %97 = vector.extract_strided_slice %95 {offsets = [0, 8], sizes = [8, 8], strides = [1, 1]} : vector<8x32xf32> to vector<8x8xf32>
    %98 = vector.extract_strided_slice %95 {offsets = [0, 24], sizes = [8, 8], strides = [1, 1]} : vector<8x32xf32> to vector<8x8xf32>
    %99 = vector.extract_strided_slice %90 {offsets = [0, 16], sizes = [8, 8], strides = [1, 1]} : vector<8x32xf32> to vector<8x8xf32>
    %100 = math.tanh %99 : vector<8x8xf32>
    %101 = arith.mulf %97, %63 : vector<8x8xf32>
    %102 = arith.mulf %96, %100 : vector<8x8xf32>
    %103 = arith.addf %101, %102 : vector<8x8xf32>
    %104 = math.tanh %103 : vector<8x8xf32>
    %105 = arith.mulf %98, %104 : vector<8x8xf32>
    %106 = vector.extract_strided_slice %2 {offsets = [1, 0], sizes = [1, 8], strides = [1, 1]} : vector<5x8xf32> to vector<1x8xf32>
    %107 = vector.broadcast %106 : vector<1x8xf32> to vector<8x8xf32>
    %108 = arith.mulf %105, %107 : vector<8x8xf32>
    %109 = arith.addf %69, %108 : vector<8x8xf32>
    %110 = vector.extract_strided_slice %8 {offsets = [24, 0], sizes = [8, 32], strides = [1, 1]} : vector<40x32xf32> to vector<8x32xf32>
    %cst_24 = arith.constant dense<0.000000e+00> : vector<8x32xf32>
    %111 = tpu.matmul %87, %0, %cst_24 {dimension_numbers = #tpu.dot_dimension_numbers<[1], [0], [0], [1], [0, 0, 1, 1], [], []>} : vector<8x8xf32>, vector<8x32xf32>, vector<8x32xf32> -> vector<8x32xf32>
    %112 = arith.addf %110, %111 : vector<8x32xf32>
    %113 = arith.negf %112 : vector<8x32xf32>
    %114 = math.exp %113 : vector<8x32xf32>
    %cst_25 = arith.constant 1.000000e+00 : f32
    %115 = vector.broadcast %cst_25 : f32 to vector<8x32xf32>
    %116 = arith.addf %115, %114 : vector<8x32xf32>
    %117 = arith.divf %115, %116 : vector<8x32xf32>
    %118 = vector.extract_strided_slice %117 {offsets = [0, 0], sizes = [8, 8], strides = [1, 1]} : vector<8x32xf32> to vector<8x8xf32>
    %119 = vector.extract_strided_slice %117 {offsets = [0, 8], sizes = [8, 8], strides = [1, 1]} : vector<8x32xf32> to vector<8x8xf32>
    %120 = vector.extract_strided_slice %117 {offsets = [0, 24], sizes = [8, 8], strides = [1, 1]} : vector<8x32xf32> to vector<8x8xf32>
    %121 = vector.extract_strided_slice %112 {offsets = [0, 16], sizes = [8, 8], strides = [1, 1]} : vector<8x32xf32> to vector<8x8xf32>
    %122 = math.tanh %121 : vector<8x8xf32>
    %123 = arith.mulf %119, %85 : vector<8x8xf32>
    %124 = arith.mulf %118, %122 : vector<8x8xf32>
    %125 = arith.addf %123, %124 : vector<8x8xf32>
    %126 = math.tanh %125 : vector<8x8xf32>
    %127 = arith.mulf %120, %126 : vector<8x8xf32>
    %128 = tpu.concatenate %87, %105 in 1 : vector<8x8xf32>, vector<8x8xf32> -> vector<8x16xf32>
    %cst_26 = arith.constant dense<0.000000e+00> : vector<8x32xf32>
    %129 = tpu.matmul %128, %1, %cst_26 {dimension_numbers = #tpu.dot_dimension_numbers<[1], [0], [0], [1], [0, 0, 1, 1], [], []>} : vector<8x16xf32>, vector<16x32xf32>, vector<8x32xf32> -> vector<8x32xf32>
    %130 = arith.addf %129, %11 : vector<8x32xf32>
    %131 = arith.negf %130 : vector<8x32xf32>
    %132 = math.exp %131 : vector<8x32xf32>
    %cst_27 = arith.constant 1.000000e+00 : f32
    %133 = vector.broadcast %cst_27 : f32 to vector<8x32xf32>
    %134 = arith.addf %133, %132 : vector<8x32xf32>
    %135 = arith.divf %133, %134 : vector<8x32xf32>
    %136 = vector.extract_strided_slice %135 {offsets = [0, 0], sizes = [8, 8], strides = [1, 1]} : vector<8x32xf32> to vector<8x8xf32>
    %137 = vector.extract_strided_slice %135 {offsets = [0, 8], sizes = [8, 8], strides = [1, 1]} : vector<8x32xf32> to vector<8x8xf32>
    %138 = vector.extract_strided_slice %135 {offsets = [0, 24], sizes = [8, 8], strides = [1, 1]} : vector<8x32xf32> to vector<8x8xf32>
    %139 = vector.extract_strided_slice %130 {offsets = [0, 16], sizes = [8, 8], strides = [1, 1]} : vector<8x32xf32> to vector<8x8xf32>
    %140 = math.tanh %139 : vector<8x8xf32>
    %141 = arith.mulf %137, %103 : vector<8x8xf32>
    %142 = arith.mulf %136, %140 : vector<8x8xf32>
    %143 = arith.addf %141, %142 : vector<8x8xf32>
    %144 = math.tanh %143 : vector<8x8xf32>
    %145 = arith.mulf %138, %144 : vector<8x8xf32>
    %146 = vector.extract_strided_slice %2 {offsets = [2, 0], sizes = [1, 8], strides = [1, 1]} : vector<5x8xf32> to vector<1x8xf32>
    %147 = vector.broadcast %146 : vector<1x8xf32> to vector<8x8xf32>
    %148 = arith.mulf %145, %147 : vector<8x8xf32>
    %149 = arith.addf %109, %148 : vector<8x8xf32>
    %150 = vector.extract_strided_slice %8 {offsets = [32, 0], sizes = [8, 32], strides = [1, 1]} : vector<40x32xf32> to vector<8x32xf32>
    %cst_28 = arith.constant dense<0.000000e+00> : vector<8x32xf32>
    %151 = tpu.matmul %127, %0, %cst_28 {dimension_numbers = #tpu.dot_dimension_numbers<[1], [0], [0], [1], [0, 0, 1, 1], [], []>} : vector<8x8xf32>, vector<8x32xf32>, vector<8x32xf32> -> vector<8x32xf32>
    %152 = arith.addf %150, %151 : vector<8x32xf32>
    %153 = arith.negf %152 : vector<8x32xf32>
    %154 = math.exp %153 : vector<8x32xf32>
    %cst_29 = arith.constant 1.000000e+00 : f32
    %155 = vector.broadcast %cst_29 : f32 to vector<8x32xf32>
    %156 = arith.addf %155, %154 : vector<8x32xf32>
    %157 = arith.divf %155, %156 : vector<8x32xf32>
    %158 = vector.extract_strided_slice %157 {offsets = [0, 0], sizes = [8, 8], strides = [1, 1]} : vector<8x32xf32> to vector<8x8xf32>
    %159 = vector.extract_strided_slice %157 {offsets = [0, 8], sizes = [8, 8], strides = [1, 1]} : vector<8x32xf32> to vector<8x8xf32>
    %160 = vector.extract_strided_slice %157 {offsets = [0, 24], sizes = [8, 8], strides = [1, 1]} : vector<8x32xf32> to vector<8x8xf32>
    %161 = vector.extract_strided_slice %152 {offsets = [0, 16], sizes = [8, 8], strides = [1, 1]} : vector<8x32xf32> to vector<8x8xf32>
    %162 = math.tanh %161 : vector<8x8xf32>
    %163 = arith.mulf %159, %125 : vector<8x8xf32>
    %164 = arith.mulf %158, %162 : vector<8x8xf32>
    %165 = arith.addf %163, %164 : vector<8x8xf32>
    %166 = math.tanh %165 : vector<8x8xf32>
    %167 = arith.mulf %160, %166 : vector<8x8xf32>
    %168 = tpu.concatenate %127, %145 in 1 : vector<8x8xf32>, vector<8x8xf32> -> vector<8x16xf32>
    %cst_30 = arith.constant dense<0.000000e+00> : vector<8x32xf32>
    %169 = tpu.matmul %168, %1, %cst_30 {dimension_numbers = #tpu.dot_dimension_numbers<[1], [0], [0], [1], [0, 0, 1, 1], [], []>} : vector<8x16xf32>, vector<16x32xf32>, vector<8x32xf32> -> vector<8x32xf32>
    %170 = arith.addf %169, %11 : vector<8x32xf32>
    %171 = arith.negf %170 : vector<8x32xf32>
    %172 = math.exp %171 : vector<8x32xf32>
    %cst_31 = arith.constant 1.000000e+00 : f32
    %173 = vector.broadcast %cst_31 : f32 to vector<8x32xf32>
    %174 = arith.addf %173, %172 : vector<8x32xf32>
    %175 = arith.divf %173, %174 : vector<8x32xf32>
    %176 = vector.extract_strided_slice %175 {offsets = [0, 0], sizes = [8, 8], strides = [1, 1]} : vector<8x32xf32> to vector<8x8xf32>
    %177 = vector.extract_strided_slice %175 {offsets = [0, 8], sizes = [8, 8], strides = [1, 1]} : vector<8x32xf32> to vector<8x8xf32>
    %178 = vector.extract_strided_slice %175 {offsets = [0, 24], sizes = [8, 8], strides = [1, 1]} : vector<8x32xf32> to vector<8x8xf32>
    %179 = vector.extract_strided_slice %170 {offsets = [0, 16], sizes = [8, 8], strides = [1, 1]} : vector<8x32xf32> to vector<8x8xf32>
    %180 = math.tanh %179 : vector<8x8xf32>
    %181 = arith.mulf %177, %143 : vector<8x8xf32>
    %182 = arith.mulf %176, %180 : vector<8x8xf32>
    %183 = arith.addf %181, %182 : vector<8x8xf32>
    %184 = math.tanh %183 : vector<8x8xf32>
    %185 = arith.mulf %178, %184 : vector<8x8xf32>
    %186 = vector.extract_strided_slice %2 {offsets = [3, 0], sizes = [1, 8], strides = [1, 1]} : vector<5x8xf32> to vector<1x8xf32>
    %187 = vector.broadcast %186 : vector<1x8xf32> to vector<8x8xf32>
    %188 = arith.mulf %185, %187 : vector<8x8xf32>
    %189 = arith.addf %149, %188 : vector<8x8xf32>
    %190 = tpu.concatenate %167, %185 in 1 : vector<8x8xf32>, vector<8x8xf32> -> vector<8x16xf32>
    %cst_32 = arith.constant dense<0.000000e+00> : vector<8x32xf32>
    %191 = tpu.matmul %190, %1, %cst_32 {dimension_numbers = #tpu.dot_dimension_numbers<[1], [0], [0], [1], [0, 0, 1, 1], [], []>} : vector<8x16xf32>, vector<16x32xf32>, vector<8x32xf32> -> vector<8x32xf32>
    %192 = arith.addf %191, %11 : vector<8x32xf32>
    %193 = arith.negf %192 : vector<8x32xf32>
    %194 = math.exp %193 : vector<8x32xf32>
    %cst_33 = arith.constant 1.000000e+00 : f32
    %195 = vector.broadcast %cst_33 : f32 to vector<8x32xf32>
    %196 = arith.addf %195, %194 : vector<8x32xf32>
    %197 = arith.divf %195, %196 : vector<8x32xf32>
    %198 = vector.extract_strided_slice %197 {offsets = [0, 0], sizes = [8, 8], strides = [1, 1]} : vector<8x32xf32> to vector<8x8xf32>
    %199 = vector.extract_strided_slice %197 {offsets = [0, 8], sizes = [8, 8], strides = [1, 1]} : vector<8x32xf32> to vector<8x8xf32>
    %200 = vector.extract_strided_slice %197 {offsets = [0, 24], sizes = [8, 8], strides = [1, 1]} : vector<8x32xf32> to vector<8x8xf32>
    %201 = vector.extract_strided_slice %192 {offsets = [0, 16], sizes = [8, 8], strides = [1, 1]} : vector<8x32xf32> to vector<8x8xf32>
    %202 = math.tanh %201 : vector<8x8xf32>
    %203 = arith.mulf %199, %183 : vector<8x8xf32>
    %204 = arith.mulf %198, %202 : vector<8x8xf32>
    %205 = arith.addf %203, %204 : vector<8x8xf32>
    %206 = math.tanh %205 : vector<8x8xf32>
    %207 = arith.mulf %200, %206 : vector<8x8xf32>
    %208 = vector.extract_strided_slice %2 {offsets = [4, 0], sizes = [1, 8], strides = [1, 1]} : vector<5x8xf32> to vector<1x8xf32>
    %209 = vector.broadcast %208 : vector<1x8xf32> to vector<8x8xf32>
    %210 = arith.mulf %207, %209 : vector<8x8xf32>
    %211 = arith.addf %189, %210 : vector<8x8xf32>
    %212 = vector.extract_strided_slice %211 {offsets = [0, 0], sizes = [4, 8], strides = [1, 1]} : vector<8x8xf32> to vector<4x8xf32>
    %cst_34 = arith.constant dense<0.000000e+00> : vector<4xf32>
    %213 = vector.multi_reduction <add>, %212, %cst_34 [1] : vector<4x8xf32> to vector<4xf32>
    %214 = vector.shape_cast %213 : vector<4xf32> to vector<4x1xf32>
    %c0_35 = arith.constant 0 : index
    %c0_36 = arith.constant 0 : index
    %215 = vector.load %arg7[%c0_35, %c0_36] : memref<1x1xf32, #tpu.memory_space<vmem>>, vector<1x1xf32>
    %216 = vector.broadcast %215 : vector<1x1xf32> to vector<4x1xf32>
    %217 = arith.addf %214, %216 : vector<4x1xf32>
    %c0_37 = arith.constant 0 : index
    %c0_38 = arith.constant 0 : index
    %218 = vector.load %arg8[%c0_37, %c0_38] : memref<4x1xf32, #tpu.memory_space<vmem>>, vector<4x1xf32>
    tpu.vector_store %arg8[%c0_37, %c0_38], %217 {strides = array<i32>} : memref<4x1xf32, #tpu.memory_space<vmem>>, vector<4x1xf32>,
    return
  }
}

</mosaic_0001>

<llo_original>
// kernel: tpu_custom_call.1
$region0: #{tpu_custom_call.1}
  #allocation0 [shape = 'u32[]', space=smem, size = 0x4, offset = 0x4, fixed_abs, tag = 'smem constant byte address 0x4 - core index']
  #allocation1 [shape = 'u32[144,128]{1,0:T(1,128)}', space=vmem, size = 0x12000, scoped, tag = 'internal scratch']
  #allocation2 [shape = 'f32[1,1]{1,0:T(1,128)S(1)}', space=vmem, size = 0x200, scoped, tag = 'scoped memory for tpu_custom_call.1']
  %s0 = inlined_call_operand.vmem [shape: f32[40,8], index: 0, kind: input, shape index: {}]
  %s1 = inlined_call_operand.vmem [shape: f32[8,32], index: 1, kind: input, shape index: {}]
  %s2 = inlined_call_operand.vmem [shape: f32[1,32], index: 2, kind: input, shape index: {}]
  %s3 = inlined_call_operand.vmem [shape: f32[8,32], index: 3, kind: input, shape index: {}]
  %s4 = inlined_call_operand.vmem [shape: f32[16,32], index: 4, kind: input, shape index: {}]
  %s5 = inlined_call_operand.vmem [shape: f32[1,32], index: 5, kind: input, shape index: {}]
  %s6 = inlined_call_operand.vmem [shape: f32[5,8], index: 6, kind: input, shape index: {}]
  %s7 = inlined_call_operand.<no memory space> [shape: f32[1,1], index: 7, kind: input, shape index: {}]
  %s8 = inlined_call_operand.vmem [shape: f32[4,1], index: 8, kind: output, shape index: {}]
  %s9 = sld [smem:[#allocation0]]
  $region42: #{tpu_custom_call.1} parent=0
    _
  %s11 = ssub.s32 1, %s9
  %s12 = scalar_select 0, %s11, %s9
  %v13 = vstv %s7
  %14 = vst [vmem:[#allocation2] sm:$0x1] %v13
  // Predicated region
  $region2: #{tpu_custom_call.1} parent=0 // pred_check
    _
  $region3: #{tpu_custom_call.1} parent=0 // pred_check_branch
    %16 = sbr.rel (0) target = $region5
  $region4: #{tpu_custom_call.1} parent=0 // pred_region
    _
  $region5: #{tpu_custom_call.1} parent=0 // pred_fallthru
    _
  // Predicated region
  $region6: #{tpu_custom_call.1} parent=0 // pred_check
    _
  $region7: #{tpu_custom_call.1} parent=0 // pred_check_branch
    %18 = sbr.rel (0) target = $region9
  $region8: #{tpu_custom_call.1} parent=0 // pred_region
    _
  $region9: #{tpu_custom_call.1} parent=0 // pred_fallthru
    _
  // Predicated region
  $region10: #{tpu_custom_call.1} parent=0 // pred_check
    _
  $region11: #{tpu_custom_call.1} parent=0 // pred_check_branch
    %20 = sbr.rel (0) target = $region13
  $region12: #{tpu_custom_call.1} parent=0 // pred_region
    _
  $region13: #{tpu_custom_call.1} parent=0 // pred_fallthru
    _
  // Predicated region
  $region14: #{tpu_custom_call.1} parent=0 // pred_check
    _
  $region15: #{tpu_custom_call.1} parent=0 // pred_check_branch
    %22 = sbr.rel (0) target = $region17
  $region16: #{tpu_custom_call.1} parent=0 // pred_region
    _
  $region17: #{tpu_custom_call.1} parent=0 // pred_fallthru
    _
  // Predicated region
  $region18: #{tpu_custom_call.1} parent=0 // pred_check
    _
  $region19: #{tpu_custom_call.1} parent=0 // pred_check_branch
    %24 = sbr.rel (0) target = $region21
  $region20: #{tpu_custom_call.1} parent=0 // pred_region
    _
  $region21: #{tpu_custom_call.1} parent=0 // pred_fallthru
    _
  // Predicated region
  $region22: #{tpu_custom_call.1} parent=0 // pred_check
    _
  $region23: #{tpu_custom_call.1} parent=0 // pred_check_branch
    %26 = sbr.rel (0) target = $region25
  $region24: #{tpu_custom_call.1} parent=0 // pred_region
    _
  $region25: #{tpu_custom_call.1} parent=0 // pred_fallthru
    _
  // Predicated region
  $region26: #{tpu_custom_call.1} parent=0 // pred_check
    _
  $region27: #{tpu_custom_call.1} parent=0 // pred_check_branch
    %28 = sbr.rel (0) target = $region29
  $region28: #{tpu_custom_call.1} parent=0 // pred_region
    _
  $region29: #{tpu_custom_call.1} parent=0 // pred_fallthru
    _
  // Predicated region
  $region30: #{tpu_custom_call.1} parent=0 // pred_check
    _
  $region31: #{tpu_custom_call.1} parent=0 // pred_check_branch
    %30 = sbr.rel (0) target = $region33
  $region32: #{tpu_custom_call.1} parent=0 // pred_region
    _
  $region33: #{tpu_custom_call.1} parent=0 // pred_fallthru
    _
  %v31 = vld [vmem:[%s3] sm:$0xff]
  %v32 = vld [vmem:[%s4] sm:$0xff]
  %v33 = vld [vmem:[%s4 + $0x8] sm:$0xff]
  %v34 = vld [vmem:[%s6] sm:$0x1f]
  %v35 = vld [vmem:[%s0] sm:$0xff]
  %v36 = vld [vmem:[%s0 + $0x8] sm:$0xff]
  %v37 = vld [vmem:[%s0 + $0x10] sm:$0xff]
  %v38 = vld [vmem:[%s0 + $0x18] sm:$0xff]
  %v39 = vld [vmem:[%s0 + $0x20] sm:$0xff]
  %v40 = vld [vmem:[%s1] sm:$0xff]
  %v41 = vld [vmem:[%s2] sm:$0x1]
  %v43 = vlaneseq
  %v44 = vshrl.u32 %v43, 7
  %v45 = vsub.s32 0, %v44
  %v46 = vrot.slane %v41, %v45
  %vm48 = vcmask 64512
  %v50 = vsel %vm48, %v35, 0
  %v53 = vsel %vm48, %v36, 0
  %v56 = vsel %vm48, %v37, 0
  %v59 = vsel %vm48, %v38, 0
  %v62 = vsel %vm48, %v39, 0
  %64 = vmatprep.subr.mxu0 0.0
  %65 = vmatpush1.msra.mxu0 %v40
  %66 = vmatprep.subr.mxu0 0.0
  %67 = vmatpush1.msra.mxu0 0.0
  %68 = vmatprep.subr.mxu0 0.0
  %69 = vmatpush1.msra.mxu0 0.0
  %70 = vmatprep.subr.mxu0 0.0
  %71 = vmatpush1.msra.mxu0 0.0
  %72 = vmatprep.subr.mxu0 0.0
  %73 = vmatpush1.msra.mxu0 0.0
  %74 = vmatprep.subr.mxu0 0.0
  %75 = vmatpush1.msra.mxu0 0.0
  %76 = vmatprep.subr.mxu0 0.0
  %77 = vmatpush1.msra.mxu0 0.0
  %78 = vmatprep.subr.mxu0 0.0
  %79 = vmatpush1.msra.mxu0 0.0
  %80 = vmatprep.subr.mxu0 0.0
  %81 = vmatpush1.msra.mxu0 0.0
  %82 = vmatprep.subr.mxu0 0.0
  %83 = vmatpush1.msra.mxu0 0.0
  %84 = vmatprep.subr.mxu0 0.0
  %85 = vmatpush1.msra.mxu0 0.0
  %86 = vmatprep.subr.mxu0 0.0
  %87 = vmatpush1.msra.mxu0 0.0
  %88 = vmatprep.subr.mxu0 0.0
  %89 = vmatpush1.msra.mxu0 0.0
  %90 = vmatprep.subr.mxu0 0.0
  %91 = vmatpush1.msra.mxu0 0.0
  %92 = vmatprep.subr.mxu0 0.0
  %93 = vmatpush1.msra.mxu0 0.0
  %94 = vmatprep.subr.mxu0 0.0
  %95 = vmatpush1.msra.mxu0 0.0
  %96 = vmatprep.subr.mxu0 0.0
  %97 = vmatpush1.msra.mxu0 0.0
  %98 = vmatprep.subr.mxu0 0.0
  %99 = vmatpush1.msra.mxu0 0.0
  %100 = vmatprep.subr.mxu0 0.0
  %101 = vmatpush1.msra.mxu0 0.0
  %102 = vmatprep.subr.mxu0 0.0
  %103 = vmatpush1.msra.mxu0 0.0
  %104 = vmatprep.subr.mxu0 0.0
  %105 = vmatpush1.msra.mxu0 0.0
  %106 = vmatprep.subr.mxu0 0.0
  %107 = vmatpush1.msra.mxu0 0.0
  %108 = vmatprep.subr.mxu0 0.0
  %109 = vmatpush1.msra.mxu0 0.0
  %110 = vmatprep.subr.mxu0 0.0
  %111 = vmatpush1.msra.mxu0 0.0
  %112 = vmatprep.subr.mxu0 0.0
  %113 = vmatpush1.msra.mxu0 0.0
  %114 = vmatprep.subr.mxu0 0.0
  %115 = vmatpush1.msra.mxu0 0.0
  %116 = vmatprep.subr.mxu0 0.0
  %117 = vmatpush1.msra.mxu0 0.0
  %118 = vmatprep.subr.mxu0 0.0
  %119 = vmatpush1.msra.mxu0 0.0
  %120 = vmatprep.subr.mxu0 0.0
  %121 = vmatpush1.msra.mxu0 0.0
  %122 = vmatprep.subr.mxu0 0.0
  %123 = vmatpush1.msra.mxu0 0.0
  %124 = vmatprep.subr.mxu0 0.0
  %125 = vmatpush1.msra.mxu0 0.0
  %126 = vmatprep.subr.mxu0 0.0
  %127 = vmatpush1.msra.mxu0 0.0
  %128 = vmatprep.mubr.f32.mxu0 0.0
  %129 = vmatmul.mubr.f32.gmra.mrb[0].mxu0 %v50
  %v130 = vpop.f32.mrb[0].mxu0
  %v131 = vadd.f32 %v46, %v130
  %v132 = vpop.f32.mrb[0].mxu0
  %133 = vmatprep.mubr.f32.mxu0 0.0
  %134 = vmatmul.mubr.f32.gmra.mrb[0].mxu0 %v53
  %v135 = vpop.f32.mrb[0].mxu0
  %v136 = vadd.f32 %v46, %v135
  %v137 = vpop.f32.mrb[0].mxu0
  %138 = vmatprep.mubr.f32.mxu0 0.0
  %139 = vmatmul.mubr.f32.gmra.mrb[0].mxu0 %v56
  %v140 = vpop.f32.mrb[0].mxu0
  %v141 = vadd.f32 %v46, %v140
  %v142 = vpop.f32.mrb[0].mxu0
  %143 = vmatprep.mubr.f32.mxu0 0.0
  %144 = vmatmul.mubr.f32.gmra.mrb[0].mxu0 %v59
  %v145 = vpop.f32.mrb[0].mxu0
  %v146 = vadd.f32 %v46, %v145
  %v147 = vpop.f32.mrb[0].mxu0
  %148 = vmatprep.mubr.f32.mxu0 0.0
  %149 = vmatmul.mubr.f32.gmra.mrb[0].mxu0 %v62
  %v150 = vpop.f32.mrb[0].mxu0
  %v151 = vadd.f32 %v46, %v150
  %v152 = vpop.f32.mrb[0].mxu0
  %153 = vdwg.mxu0
  %v154 = vld [vmem:[%s5] sm:$0x1]
  %v156 = vlaneseq
  %v157 = vshrl.u32 %v156, 7
  %v158 = vsub.s32 0, %v157
  %v159 = vrot.slane %v154, %v158
  %v161 = vxor.u32 %v131, 2147483648
  %v162 = vmul.f32 %v161, 1.442695
  %v163 = vpow.pop %v162
  %v164 = vadd.f32 %v163, 1.0
  %v165 = vrcp.pop %v164
  %v166 = vmul.f32 1.0, %v165
  %v167 = vtanh.pop %v131
  %v168 = vmul.f32 %v166, 0.0
  %170 = vrot.lane.b32.xlu0 %v167, 112
  %v171 = vpop.permute.xlu0 %170
  %v173 = vmul.f32 %v166, %v171
  %175 = vrot.lane.b32.xlu0 %v173, 8
  %v176 = vpop.permute.xlu0 %175
  %v178 = vadd.f32 %v168, %v176
  %v179 = vtanh.pop %v178
  %181 = vrot.lane.b32.xlu0 %v179, 16
  %v182 = vpop.permute.xlu0 %181
  %v184 = vmul.f32 %v166, %v182
  %186 = vrot.lane.b32.xlu0 %v184, 104
  %v187 = vpop.permute.xlu0 %186
  %v188 = vsel %vm48, %v187, 0
  %190 = vmatprep.subr.mxu0 0.0
  %191 = vmatpush1.msra.mxu0 %v31
  %192 = vmatprep.subr.mxu0 0.0
  %193 = vmatpush1.msra.mxu0 0.0
  %194 = vmatprep.subr.mxu0 0.0
  %195 = vmatpush1.msra.mxu0 0.0
  %196 = vmatprep.subr.mxu0 0.0
  %197 = vmatpush1.msra.mxu0 0.0
  %198 = vmatprep.subr.mxu0 0.0
  %199 = vmatpush1.msra.mxu0 0.0
  %200 = vmatprep.subr.mxu0 0.0
  %201 = vmatpush1.msra.mxu0 0.0
  %202 = vmatprep.subr.mxu0 0.0
  %203 = vmatpush1.msra.mxu0 0.0
  %204 = vmatprep.subr.mxu0 0.0
  %205 = vmatpush1.msra.mxu0 0.0
  %206 = vmatprep.subr.mxu0 0.0
  %207 = vmatpush1.msra.mxu0 0.0
  %208 = vmatprep.subr.mxu0 0.0
  %209 = vmatpush1.msra.mxu0 0.0
  %210 = vmatprep.subr.mxu0 0.0
  %211 = vmatpush1.msra.mxu0 0.0
  %212 = vmatprep.subr.mxu0 0.0
  %213 = vmatpush1.msra.mxu0 0.0
  %214 = vmatprep.subr.mxu0 0.0
  %215 = vmatpush1.msra.mxu0 0.0
  %216 = vmatprep.subr.mxu0 0.0
  %217 = vmatpush1.msra.mxu0 0.0
  %218 = vmatprep.subr.mxu0 0.0
  %219 = vmatpush1.msra.mxu0 0.0
  %220 = vmatprep.subr.mxu0 0.0
  %221 = vmatpush1.msra.mxu0 0.0
  %222 = vmatprep.subr.mxu0 0.0
  %223 = vmatpush1.msra.mxu0 0.0
  %224 = vmatprep.subr.mxu0 0.0
  %225 = vmatpush1.msra.mxu0 0.0
  %226 = vmatprep.subr.mxu0 0.0
  %227 = vmatpush1.msra.mxu0 0.0
  %228 = vmatprep.subr.mxu0 0.0
  %229 = vmatpush1.msra.mxu0 0.0
  %230 = vmatprep.subr.mxu0 0.0
  %231 = vmatpush1.msra.mxu0 0.0
  %232 = vmatprep.subr.mxu0 0.0
  %233 = vmatpush1.msra.mxu0 0.0
  %234 = vmatprep.subr.mxu0 0.0
  %235 = vmatpush1.msra.mxu0 0.0
  %236 = vmatprep.subr.mxu0 0.0
  %237 = vmatpush1.msra.mxu0 0.0
  %238 = vmatprep.subr.mxu0 0.0
  %239 = vmatpush1.msra.mxu0 0.0
  %240 = vmatprep.subr.mxu0 0.0
  %241 = vmatpush1.msra.mxu0 0.0
  %242 = vmatprep.subr.mxu0 0.0
  %243 = vmatpush1.msra.mxu0 0.0
  %244 = vmatprep.subr.mxu0 0.0
  %245 = vmatpush1.msra.mxu0 0.0
  %246 = vmatprep.subr.mxu0 0.0
  %247 = vmatpush1.msra.mxu0 0.0
  %248 = vmatprep.subr.mxu0 0.0
  %249 = vmatpush1.msra.mxu0 0.0
  %250 = vmatprep.subr.mxu0 0.0
  %251 = vmatpush1.msra.mxu0 0.0
  %252 = vmatprep.subr.mxu0 0.0
  %253 = vmatpush1.msra.mxu0 0.0
  %254 = vmatprep.mubr.f32.mxu0 0.0
  %255 = vmatmul.mubr.f32.gmra.mrb[0].mxu0 %v188
  %v256 = vpop.f32.mrb[0].mxu0
  %v257 = vadd.f32 0.0, %v256
  %v258 = vpop.f32.mrb[0].mxu0
  %259 = vdwg.mxu0
  %v260 = vadd.f32 %v136, %v257
  %v261 = vxor.u32 %v260, 2147483648
  %v262 = vmul.f32 %v261, 1.442695
  %v263 = vpow.pop %v262
  %v264 = vadd.f32 %v263, 1.0
  %v265 = vrcp.pop %v264
  %v266 = vmul.f32 1.0, %v265
  %v267 = vtanh.pop %v260
  %v268 = vmul.f32 %v266, %v178
  %270 = vrot.lane.b32.xlu0 %v267, 112
  %v271 = vpop.permute.xlu0 %270
  %v273 = vmul.f32 %v266, %v271
  %275 = vrot.lane.b32.xlu0 %v273, 8
  %v276 = vpop.permute.xlu0 %275
  %v278 = vadd.f32 %v268, %v276
  %v279 = vtanh.pop %v278
  %281 = vrot.lane.b32.xlu0 %v279, 16
  %v282 = vpop.permute.xlu0 %281
  %v284 = vmul.f32 %v266, %v282
  %285 = vmatprep.subr.mxu0 0.0
  %286 = vmatpush1.msra.mxu0 %v32
  %287 = vmatprep.subr.mxu0 0.0
  %288 = vmatpush1.msra.mxu0 0.0
  %289 = vmatprep.subr.mxu0 0.0
  %290 = vmatpush1.msra.mxu0 0.0
  %291 = vmatprep.subr.mxu0 0.0
  %292 = vmatpush1.msra.mxu0 0.0
  %293 = vmatprep.subr.mxu0 0.0
  %294 = vmatpush1.msra.mxu0 0.0
  %295 = vmatprep.subr.mxu0 0.0
  %296 = vmatpush1.msra.mxu0 0.0
  %297 = vmatprep.subr.mxu0 0.0
  %298 = vmatpush1.msra.mxu0 0.0
  %299 = vmatprep.subr.mxu0 0.0
  %300 = vmatpush1.msra.mxu0 0.0
  %301 = vmatprep.subr.mxu0 0.0
  %302 = vmatpush1.msra.mxu0 0.0
  %303 = vmatprep.subr.mxu0 0.0
  %304 = vmatpush1.msra.mxu0 0.0
  %305 = vmatprep.subr.mxu0 0.0
  %306 = vmatpush1.msra.mxu0 0.0
  %307 = vmatprep.subr.mxu0 0.0
  %308 = vmatpush1.msra.mxu0 0.0
  %309 = vmatprep.subr.mxu0 0.0
  %310 = vmatpush1.msra.mxu0 0.0
  %311 = vmatprep.subr.mxu0 0.0
  %312 = vmatpush1.msra.mxu0 0.0
  %313 = vmatprep.subr.mxu0 0.0
  %314 = vmatpush1.msra.mxu0 0.0
  %315 = vmatprep.subr.mxu0 0.0
  %316 = vmatpush1.msra.mxu0 0.0
  %317 = vmatprep.subr.mxu0 0.0
  %318 = vmatpush1.msra.mxu0 0.0
  %319 = vmatprep.subr.mxu0 0.0
  %320 = vmatpush1.msra.mxu0 0.0
  %321 = vmatprep.subr.mxu0 0.0
  %322 = vmatpush1.msra.mxu0 0.0
  %323 = vmatprep.subr.mxu0 0.0
  %324 = vmatpush1.msra.mxu0 0.0
  %325 = vmatprep.subr.mxu0 0.0
  %326 = vmatpush1.msra.mxu0 0.0
  %327 = vmatprep.subr.mxu0 0.0
  %328 = vmatpush1.msra.mxu0 0.0
  %329 = vmatprep.subr.mxu0 0.0
  %330 = vmatpush1.msra.mxu0 0.0
  %331 = vmatprep.subr.mxu0 0.0
  %332 = vmatpush1.msra.mxu0 0.0
  %333 = vmatprep.subr.mxu0 0.0
  %334 = vmatpush1.msra.mxu0 0.0
  %335 = vmatprep.subr.mxu0 0.0
  %336 = vmatpush1.msra.mxu0 0.0
  %337 = vmatprep.subr.mxu0 0.0
  %338 = vmatpush1.msra.mxu0 0.0
  %339 = vmatprep.subr.mxu0 0.0
  %340 = vmatpush1.msra.mxu0 0.0
  %341 = vmatprep.subr.mxu0 0.0
  %342 = vmatpush1.msra.mxu0 0.0
  %343 = vmatprep.subr.mxu0 0.0
  %344 = vmatpush1.msra.mxu0 0.0
  %345 = vmatprep.subr.mxu0 0.0
  %346 = vmatpush1.msra.mxu0 0.0
  %347 = vmatprep.subr.mxu0 0.0
  %348 = vmatpush1.msra.mxu0 0.0
  %349 = vmatprep.mubr.f32.mxu0 0.0
  %350 = vmatmul.mubr.f32.gmra.mrb[0].mxu0 %v188
  %v351 = vpop.f32.mrb[0].mxu0
  %v352 = vadd.f32 %v159, %v351
  %v353 = vpop.f32.mrb[0].mxu0
  %354 = vdwg.mxu0
  %v355 = vxor.u32 %v352, 2147483648
  %v356 = vmul.f32 %v355, 1.442695
  %v357 = vpow.pop %v356
  %v358 = vadd.f32 %v357, 1.0
  %v359 = vrcp.pop %v358
  %v360 = vmul.f32 1.0, %v359
  %v361 = vtanh.pop %v352
  %v362 = vmul.f32 %v360, 0.0
  %364 = vrot.lane.b32.xlu0 %v361, 112
  %v365 = vpop.permute.xlu0 %364
  %v367 = vmul.f32 %v360, %v365
  %369 = vrot.lane.b32.xlu0 %v367, 8
  %v370 = vpop.permute.xlu0 %369
  %v372 = vadd.f32 %v362, %v370
  %v373 = vtanh.pop %v372
  %375 = vrot.lane.b32.xlu0 %v373, 16
  %v376 = vpop.permute.xlu0 %375
  %v378 = vmul.f32 %v360, %v376
  %v379 = vlaneseq
  %v380 = vshrl.u32 %v379, 7
  %v381 = vsub.s32 0, %v380
  %v382 = vrot.slane %v34, %v381
  %384 = vrot.lane.b32.xlu0 %v382, 24
  %v385 = vpop.permute.xlu0 %384
  %v387 = vmul.f32 %v378, %v385
  %v388 = vadd.f32 %v387, 0.0
  %390 = vrot.lane.b32.xlu0 %v284, 104
  %v391 = vpop.permute.xlu0 %390
  %v392 = vsel %vm48, %v391, 0
  %394 = vmatprep.subr.mxu0 0.0
  %395 = vmatpush1.msra.mxu0 %v31
  %396 = vmatprep.subr.mxu0 0.0
  %397 = vmatpush1.msra.mxu0 0.0
  %398 = vmatprep.subr.mxu0 0.0
  %399 = vmatpush1.msra.mxu0 0.0
  %400 = vmatprep.subr.mxu0 0.0
  %401 = vmatpush1.msra.mxu0 0.0
  %402 = vmatprep.subr.mxu0 0.0
  %403 = vmatpush1.msra.mxu0 0.0
  %404 = vmatprep.subr.mxu0 0.0
  %405 = vmatpush1.msra.mxu0 0.0
  %406 = vmatprep.subr.mxu0 0.0
  %407 = vmatpush1.msra.mxu0 0.0
  %408 = vmatprep.subr.mxu0 0.0
  %409 = vmatpush1.msra.mxu0 0.0
  %410 = vmatprep.subr.mxu0 0.0
  %411 = vmatpush1.msra.mxu0 0.0
  %412 = vmatprep.subr.mxu0 0.0
  %413 = vmatpush1.msra.mxu0 0.0
  %414 = vmatprep.subr.mxu0 0.0
  %415 = vmatpush1.msra.mxu0 0.0
  %416 = vmatprep.subr.mxu0 0.0
  %417 = vmatpush1.msra.mxu0 0.0
  %418 = vmatprep.subr.mxu0 0.0
  %419 = vmatpush1.msra.mxu0 0.0
  %420 = vmatprep.subr.mxu0 0.0
  %421 = vmatpush1.msra.mxu0 0.0
  %422 = vmatprep.subr.mxu0 0.0
  %423 = vmatpush1.msra.mxu0 0.0
  %424 = vmatprep.subr.mxu0 0.0
  %425 = vmatpush1.msra.mxu0 0.0
  %426 = vmatprep.subr.mxu0 0.0
  %427 = vmatpush1.msra.mxu0 0.0
  %428 = vmatprep.subr.mxu0 0.0
  %429 = vmatpush1.msra.mxu0 0.0
  %430 = vmatprep.subr.mxu0 0.0
  %431 = vmatpush1.msra.mxu0 0.0
  %432 = vmatprep.subr.mxu0 0.0
  %433 = vmatpush1.msra.mxu0 0.0
  %434 = vmatprep.subr.mxu0 0.0
  %435 = vmatpush1.msra.mxu0 0.0
  %436 = vmatprep.subr.mxu0 0.0
  %437 = vmatpush1.msra.mxu0 0.0
  %438 = vmatprep.subr.mxu0 0.0
  %439 = vmatpush1.msra.mxu0 0.0
  %440 = vmatprep.subr.mxu0 0.0
  %441 = vmatpush1.msra.mxu0 0.0
  %442 = vmatprep.subr.mxu0 0.0
  %443 = vmatpush1.msra.mxu0 0.0
  %444 = vmatprep.subr.mxu0 0.0
  %445 = vmatpush1.msra.mxu0 0.0
  %446 = vmatprep.subr.mxu0 0.0
  %447 = vmatpush1.msra.mxu0 0.0
  %448 = vmatprep.subr.mxu0 0.0
  %449 = vmatpush1.msra.mxu0 0.0
  %450 = vmatprep.subr.mxu0 0.0
  %451 = vmatpush1.msra.mxu0 0.0
  %452 = vmatprep.subr.mxu0 0.0
  %453 = vmatpush1.msra.mxu0 0.0
  %454 = vmatprep.subr.mxu0 0.0
  %455 = vmatpush1.msra.mxu0 0.0
  %456 = vmatprep.subr.mxu0 0.0
  %457 = vmatpush1.msra.mxu0 0.0
  %458 = vmatprep.mubr.f32.mxu0 0.0
  %459 = vmatmul.mubr.f32.gmra.mrb[0].mxu0 %v392
  %v460 = vpop.f32.mrb[0].mxu0
  %v461 = vadd.f32 0.0, %v460
  %v462 = vpop.f32.mrb[0].mxu0
  %463 = vdwg.mxu0
  %v464 = vadd.f32 %v141, %v461
  %v465 = vxor.u32 %v464, 2147483648
  %v466 = vmul.f32 %v465, 1.442695
  %v467 = vpow.pop %v466
  %v468 = vadd.f32 %v467, 1.0
  %v469 = vrcp.pop %v468
  %v470 = vmul.f32 1.0, %v469
  %v471 = vtanh.pop %v464
  %v472 = vmul.f32 %v470, %v278
  %474 = vrot.lane.b32.xlu0 %v471, 112
  %v475 = vpop.permute.xlu0 %474
  %v477 = vmul.f32 %v470, %v475
  %479 = vrot.lane.b32.xlu0 %v477, 8
  %v480 = vpop.permute.xlu0 %479
  %v482 = vadd.f32 %v472, %v480
  %v483 = vtanh.pop %v482
  %485 = vrot.lane.b32.xlu0 %v483, 16
  %v486 = vpop.permute.xlu0 %485
  %v488 = vmul.f32 %v470, %v486
  %491 = vrot.lane.b32.xlu0 %v378, 112
  %v492 = vpop.permute.xlu0 %491
  %v494 = vsel %vm48, %v391, %v492
  %vm495 = vcmask 130048
  %v497 = vsel %vm495, %v494, 0
  %499 = vmatprep.subr.mxu0 0.0
  %500 = vmatpush1.msra.mxu0 %v32
  %501 = vmatprep.subr.mxu0 0.0
  %502 = vmatpush1.msra.mxu0 %v33
  %503 = vmatprep.subr.mxu0 0.0
  %504 = vmatpush1.msra.mxu0 0.0
  %505 = vmatprep.subr.mxu0 0.0
  %506 = vmatpush1.msra.mxu0 0.0
  %507 = vmatprep.subr.mxu0 0.0
  %508 = vmatpush1.msra.mxu0 0.0
  %509 = vmatprep.subr.mxu0 0.0
  %510 = vmatpush1.msra.mxu0 0.0
  %511 = vmatprep.subr.mxu0 0.0
  %512 = vmatpush1.msra.mxu0 0.0
  %513 = vmatprep.subr.mxu0 0.0
  %514 = vmatpush1.msra.mxu0 0.0
  %515 = vmatprep.subr.mxu0 0.0
  %516 = vmatpush1.msra.mxu0 0.0
  %517 = vmatprep.subr.mxu0 0.0
  %518 = vmatpush1.msra.mxu0 0.0
  %519 = vmatprep.subr.mxu0 0.0
  %520 = vmatpush1.msra.mxu0 0.0
  %521 = vmatprep.subr.mxu0 0.0
  %522 = vmatpush1.msra.mxu0 0.0
  %523 = vmatprep.subr.mxu0 0.0
  %524 = vmatpush1.msra.mxu0 0.0
  %525 = vmatprep.subr.mxu0 0.0
  %526 = vmatpush1.msra.mxu0 0.0
  %527 = vmatprep.subr.mxu0 0.0
  %528 = vmatpush1.msra.mxu0 0.0
  %529 = vmatprep.subr.mxu0 0.0
  %530 = vmatpush1.msra.mxu0 0.0
  %531 = vmatprep.subr.mxu0 0.0
  %532 = vmatpush1.msra.mxu0 0.0
  %533 = vmatprep.subr.mxu0 0.0
  %534 = vmatpush1.msra.mxu0 0.0
  %535 = vmatprep.subr.mxu0 0.0
  %536 = vmatpush1.msra.mxu0 0.0
  %537 = vmatprep.subr.mxu0 0.0
  %538 = vmatpush1.msra.mxu0 0.0
  %539 = vmatprep.subr.mxu0 0.0
  %540 = vmatpush1.msra.mxu0 0.0
  %541 = vmatprep.subr.mxu0 0.0
  %542 = vmatpush1.msra.mxu0 0.0
  %543 = vmatprep.subr.mxu0 0.0
  %544 = vmatpush1.msra.mxu0 0.0
  %545 = vmatprep.subr.mxu0 0.0
  %546 = vmatpush1.msra.mxu0 0.0
  %547 = vmatprep.subr.mxu0 0.0
  %548 = vmatpush1.msra.mxu0 0.0
  %549 = vmatprep.subr.mxu0 0.0
  %550 = vmatpush1.msra.mxu0 0.0
  %551 = vmatprep.subr.mxu0 0.0
  %552 = vmatpush1.msra.mxu0 0.0
  %553 = vmatprep.subr.mxu0 0.0
  %554 = vmatpush1.msra.mxu0 0.0
  %555 = vmatprep.subr.mxu0 0.0
  %556 = vmatpush1.msra.mxu0 0.0
  %557 = vmatprep.subr.mxu0 0.0
  %558 = vmatpush1.msra.mxu0 0.0
  %559 = vmatprep.subr.mxu0 0.0
  %560 = vmatpush1.msra.mxu0 0.0
  %561 = vmatprep.subr.mxu0 0.0
  %562 = vmatpush1.msra.mxu0 0.0
  %563 = vmatprep.mubr.f32.mxu0 0.0
  %564 = vmatmul.mubr.f32.gmra.mrb[0].mxu0 %v497
  %v565 = vpop.f32.mrb[0].mxu0
  %v566 = vadd.f32 %v159, %v565
  %v567 = vpop.f32.mrb[0].mxu0
  %568 = vdwg.mxu0
  %v569 = vxor.u32 %v566, 2147483648
  %v570 = vmul.f32 %v569, 1.442695
  %v571 = vpow.pop %v570
  %v572 = vadd.f32 %v571, 1.0
  %v573 = vrcp.pop %v572
  %v574 = vmul.f32 1.0, %v573
  %v575 = vtanh.pop %v566
  %v576 = vmul.f32 %v574, %v372
  %578 = vrot.lane.b32.xlu0 %v575, 112
  %v579 = vpop.permute.xlu0 %578
  %v581 = vmul.f32 %v574, %v579
  %583 = vrot.lane.b32.xlu0 %v581, 8
  %v584 = vpop.permute.xlu0 %583
  %v586 = vadd.f32 %v576, %v584
  %v587 = vtanh.pop %v586
  %589 = vrot.lane.b32.xlu0 %v587, 16
  %v590 = vpop.permute.xlu0 %589
  %v592 = vmul.f32 %v574, %v590
  %v593 = vlaneseq
  %v594 = vshrl.u32 %v593, 7
  %v595 = vsub.s32 1, %v594
  %v596 = vrot.slane %v34, %v595
  %598 = vrot.lane.b32.xlu0 %v596, 24
  %v599 = vpop.permute.xlu0 %598
  %v601 = vmul.f32 %v592, %v599
  %v602 = vadd.f32 %v388, %v601
  %604 = vrot.lane.b32.xlu0 %v488, 104
  %v605 = vpop.permute.xlu0 %604
  %v606 = vsel %vm48, %v605, 0
  %608 = vmatprep.subr.mxu0 0.0
  %609 = vmatpush1.msra.mxu0 %v31
  %610 = vmatprep.subr.mxu0 0.0
  %611 = vmatpush1.msra.mxu0 0.0
  %612 = vmatprep.subr.mxu0 0.0
  %613 = vmatpush1.msra.mxu0 0.0
  %614 = vmatprep.subr.mxu0 0.0
  %615 = vmatpush1.msra.mxu0 0.0
  %616 = vmatprep.subr.mxu0 0.0
  %617 = vmatpush1.msra.mxu0 0.0
  %618 = vmatprep.subr.mxu0 0.0
  %619 = vmatpush1.msra.mxu0 0.0
  %620 = vmatprep.subr.mxu0 0.0
  %621 = vmatpush1.msra.mxu0 0.0
  %622 = vmatprep.subr.mxu0 0.0
  %623 = vmatpush1.msra.mxu0 0.0
  %624 = vmatprep.subr.mxu0 0.0
  %625 = vmatpush1.msra.mxu0 0.0
  %626 = vmatprep.subr.mxu0 0.0
  %627 = vmatpush1.msra.mxu0 0.0
  %628 = vmatprep.subr.mxu0 0.0
  %629 = vmatpush1.msra.mxu0 0.0
  %630 = vmatprep.subr.mxu0 0.0
  %631 = vmatpush1.msra.mxu0 0.0
  %632 = vmatprep.subr.mxu0 0.0
  %633 = vmatpush1.msra.mxu0 0.0
  %634 = vmatprep.subr.mxu0 0.0
  %635 = vmatpush1.msra.mxu0 0.0
  %636 = vmatprep.subr.mxu0 0.0
  %637 = vmatpush1.msra.mxu0 0.0
  %638 = vmatprep.subr.mxu0 0.0
  %639 = vmatpush1.msra.mxu0 0.0
  %640 = vmatprep.subr.mxu0 0.0
  %641 = vmatpush1.msra.mxu0 0.0
  %642 = vmatprep.subr.mxu0 0.0
  %643 = vmatpush1.msra.mxu0 0.0
  %644 = vmatprep.subr.mxu0 0.0
  %645 = vmatpush1.msra.mxu0 0.0
  %646 = vmatprep.subr.mxu0 0.0
  %647 = vmatpush1.msra.mxu0 0.0
  %648 = vmatprep.subr.mxu0 0.0
  %649 = vmatpush1.msra.mxu0 0.0
  %650 = vmatprep.subr.mxu0 0.0
  %651 = vmatpush1.msra.mxu0 0.0
  %652 = vmatprep.subr.mxu0 0.0
  %653 = vmatpush1.msra.mxu0 0.0
  %654 = vmatprep.subr.mxu0 0.0
  %655 = vmatpush1.msra.mxu0 0.0
  %656 = vmatprep.subr.mxu0 0.0
  %657 = vmatpush1.msra.mxu0 0.0
  %658 = vmatprep.subr.mxu0 0.0
  %659 = vmatpush1.msra.mxu0 0.0
  %660 = vmatprep.subr.mxu0 0.0
  %661 = vmatpush1.msra.mxu0 0.0
  %662 = vmatprep.subr.mxu0 0.0
  %663 = vmatpush1.msra.mxu0 0.0
  %664 = vmatprep.subr.mxu0 0.0
  %665 = vmatpush1.msra.mxu0 0.0
  %666 = vmatprep.subr.mxu0 0.0
  %667 = vmatpush1.msra.mxu0 0.0
  %668 = vmatprep.subr.mxu0 0.0
  %669 = vmatpush1.msra.mxu0 0.0
  %670 = vmatprep.subr.mxu0 0.0
  %671 = vmatpush1.msra.mxu0 0.0
  %672 = vmatprep.mubr.f32.mxu0 0.0
  %673 = vmatmul.mubr.f32.gmra.mrb[0].mxu0 %v606
  %v674 = vpop.f32.mrb[0].mxu0
  %v675 = vadd.f32 0.0, %v674
  %v676 = vpop.f32.mrb[0].mxu0
  %677 = vdwg.mxu0
  %v678 = vadd.f32 %v146, %v675
  %v679 = vxor.u32 %v678, 2147483648
  %v680 = vmul.f32 %v679, 1.442695
  %v681 = vpow.pop %v680
  %v682 = vadd.f32 %v681, 1.0
  %v683 = vrcp.pop %v682
  %v684 = vmul.f32 1.0, %v683
  %v685 = vtanh.pop %v678
  %v686 = vmul.f32 %v684, %v482
  %688 = vrot.lane.b32.xlu0 %v685, 112
  %v689 = vpop.permute.xlu0 %688
  %v691 = vmul.f32 %v684, %v689
  %693 = vrot.lane.b32.xlu0 %v691, 8
  %v694 = vpop.permute.xlu0 %693
  %v696 = vadd.f32 %v686, %v694
  %v697 = vtanh.pop %v696
  %699 = vrot.lane.b32.xlu0 %v697, 16
  %v700 = vpop.permute.xlu0 %699
  %v702 = vmul.f32 %v684, %v700
  %705 = vrot.lane.b32.xlu0 %v592, 112
  %v706 = vpop.permute.xlu0 %705
  %v708 = vsel %vm48, %v605, %v706
  %v710 = vsel %vm495, %v708, 0
  %712 = vmatprep.subr.mxu0 0.0
  %713 = vmatpush1.msra.mxu0 %v32
  %714 = vmatprep.subr.mxu0 0.0
  %715 = vmatpush1.msra.mxu0 %v33
  %716 = vmatprep.subr.mxu0 0.0
  %717 = vmatpush1.msra.mxu0 0.0
  %718 = vmatprep.subr.mxu0 0.0
  %719 = vmatpush1.msra.mxu0 0.0
  %720 = vmatprep.subr.mxu0 0.0
  %721 = vmatpush1.msra.mxu0 0.0
  %722 = vmatprep.subr.mxu0 0.0
  %723 = vmatpush1.msra.mxu0 0.0
  %724 = vmatprep.subr.mxu0 0.0
  %725 = vmatpush1.msra.mxu0 0.0
  %726 = vmatprep.subr.mxu0 0.0
  %727 = vmatpush1.msra.mxu0 0.0
  %728 = vmatprep.subr.mxu0 0.0
  %729 = vmatpush1.msra.mxu0 0.0
  %730 = vmatprep.subr.mxu0 0.0
  %731 = vmatpush1.msra.mxu0 0.0
  %732 = vmatprep.subr.mxu0 0.0
  %733 = vmatpush1.msra.mxu0 0.0
  %734 = vmatprep.subr.mxu0 0.0
  %735 = vmatpush1.msra.mxu0 0.0
  %736 = vmatprep.subr.mxu0 0.0
  %737 = vmatpush1.msra.mxu0 0.0
  %738 = vmatprep.subr.mxu0 0.0
  %739 = vmatpush1.msra.mxu0 0.0
  %740 = vmatprep.subr.mxu0 0.0
  %741 = vmatpush1.msra.mxu0 0.0
  %742 = vmatprep.subr.mxu0 0.0
  %743 = vmatpush1.msra.mxu0 0.0
  %744 = vmatprep.subr.mxu0 0.0
  %745 = vmatpush1.msra.mxu0 0.0
  %746 = vmatprep.subr.mxu0 0.0
  %747 = vmatpush1.msra.mxu0 0.0
  %748 = vmatprep.subr.mxu0 0.0
  %749 = vmatpush1.msra.mxu0 0.0
  %750 = vmatprep.subr.mxu0 0.0
  %751 = vmatpush1.msra.mxu0 0.0
  %752 = vmatprep.subr.mxu0 0.0
  %753 = vmatpush1.msra.mxu0 0.0
  %754 = vmatprep.subr.mxu0 0.0
  %755 = vmatpush1.msra.mxu0 0.0
  %756 = vmatprep.subr.mxu0 0.0
  %757 = vmatpush1.msra.mxu0 0.0
  %758 = vmatprep.subr.mxu0 0.0
  %759 = vmatpush1.msra.mxu0 0.0
  %760 = vmatprep.subr.mxu0 0.0
  %761 = vmatpush1.msra.mxu0 0.0
  %762 = vmatprep.subr.mxu0 0.0
  %763 = vmatpush1.msra.mxu0 0.0
  %764 = vmatprep.subr.mxu0 0.0
  %765 = vmatpush1.msra.mxu0 0.0
  %766 = vmatprep.subr.mxu0 0.0
  %767 = vmatpush1.msra.mxu0 0.0
  %768 = vmatprep.subr.mxu0 0.0
  %769 = vmatpush1.msra.mxu0 0.0
  %770 = vmatprep.subr.mxu0 0.0
  %771 = vmatpush1.msra.mxu0 0.0
  %772 = vmatprep.subr.mxu0 0.0
  %773 = vmatpush1.msra.mxu0 0.0
  %774 = vmatprep.subr.mxu0 0.0
  %775 = vmatpush1.msra.mxu0 0.0
  %776 = vmatprep.mubr.f32.mxu0 0.0
  %777 = vmatmul.mubr.f32.gmra.mrb[0].mxu0 %v710
  %v778 = vpop.f32.mrb[0].mxu0
  %v779 = vadd.f32 %v159, %v778
  %v780 = vpop.f32.mrb[0].mxu0
  %781 = vdwg.mxu0
  %v782 = vxor.u32 %v779, 2147483648
  %v783 = vmul.f32 %v782, 1.442695
  %v784 = vpow.pop %v783
  %v785 = vadd.f32 %v784, 1.0
  %v786 = vrcp.pop %v785
  %v787 = vmul.f32 1.0, %v786
  %v788 = vtanh.pop %v779
  %v789 = vmul.f32 %v787, %v586
  %791 = vrot.lane.b32.xlu0 %v788, 112
  %v792 = vpop.permute.xlu0 %791
  %v794 = vmul.f32 %v787, %v792
  %796 = vrot.lane.b32.xlu0 %v794, 8
  %v797 = vpop.permute.xlu0 %796
  %v799 = vadd.f32 %v789, %v797
  %v800 = vtanh.pop %v799
  %802 = vrot.lane.b32.xlu0 %v800, 16
  %v803 = vpop.permute.xlu0 %802
  %v805 = vmul.f32 %v787, %v803
  %v806 = vlaneseq
  %v807 = vshrl.u32 %v806, 7
  %v808 = vsub.s32 2, %v807
  %v809 = vrot.slane %v34, %v808
  %811 = vrot.lane.b32.xlu0 %v809, 24
  %v812 = vpop.permute.xlu0 %811
  %v814 = vmul.f32 %v805, %v812
  %v815 = vadd.f32 %v602, %v814
  %817 = vrot.lane.b32.xlu0 %v702, 104
  %v818 = vpop.permute.xlu0 %817
  %v819 = vsel %vm48, %v818, 0
  %821 = vmatprep.subr.mxu0 0.0
  %822 = vmatpush1.msra.mxu0 %v31
  %823 = vmatprep.subr.mxu0 0.0
  %824 = vmatpush1.msra.mxu0 0.0
  %825 = vmatprep.subr.mxu0 0.0
  %826 = vmatpush1.msra.mxu0 0.0
  %827 = vmatprep.subr.mxu0 0.0
  %828 = vmatpush1.msra.mxu0 0.0
  %829 = vmatprep.subr.mxu0 0.0
  %830 = vmatpush1.msra.mxu0 0.0
  %831 = vmatprep.subr.mxu0 0.0
  %832 = vmatpush1.msra.mxu0 0.0
  %833 = vmatprep.subr.mxu0 0.0
  %834 = vmatpush1.msra.mxu0 0.0
  %835 = vmatprep.subr.mxu0 0.0
  %836 = vmatpush1.msra.mxu0 0.0
  %837 = vmatprep.subr.mxu0 0.0
  %838 = vmatpush1.msra.mxu0 0.0
  %839 = vmatprep.subr.mxu0 0.0
  %840 = vmatpush1.msra.mxu0 0.0
  %841 = vmatprep.subr.mxu0 0.0
  %842 = vmatpush1.msra.mxu0 0.0
  %843 = vmatprep.subr.mxu0 0.0
  %844 = vmatpush1.msra.mxu0 0.0
  %845 = vmatprep.subr.mxu0 0.0
  %846 = vmatpush1.msra.mxu0 0.0
  %847 = vmatprep.subr.mxu0 0.0
  %848 = vmatpush1.msra.mxu0 0.0
  %849 = vmatprep.subr.mxu0 0.0
  %850 = vmatpush1.msra.mxu0 0.0
  %851 = vmatprep.subr.mxu0 0.0
  %852 = vmatpush1.msra.mxu0 0.0
  %853 = vmatprep.subr.mxu0 0.0
  %854 = vmatpush1.msra.mxu0 0.0
  %855 = vmatprep.subr.mxu0 0.0
  %856 = vmatpush1.msra.mxu0 0.0
  %857 = vmatprep.subr.mxu0 0.0
  %858 = vmatpush1.msra.mxu0 0.0
  %859 = vmatprep.subr.mxu0 0.0
  %860 = vmatpush1.msra.mxu0 0.0
  %861 = vmatprep.subr.mxu0 0.0
  %862 = vmatpush1.msra.mxu0 0.0
  %863 = vmatprep.subr.mxu0 0.0
  %864 = vmatpush1.msra.mxu0 0.0
  %865 = vmatprep.subr.mxu0 0.0
  %866 = vmatpush1.msra.mxu0 0.0
  %867 = vmatprep.subr.mxu0 0.0
  %868 = vmatpush1.msra.mxu0 0.0
  %869 = vmatprep.subr.mxu0 0.0
  %870 = vmatpush1.msra.mxu0 0.0
  %871 = vmatprep.subr.mxu0 0.0
  %872 = vmatpush1.msra.mxu0 0.0
  %873 = vmatprep.subr.mxu0 0.0
  %874 = vmatpush1.msra.mxu0 0.0
  %875 = vmatprep.subr.mxu0 0.0
  %876 = vmatpush1.msra.mxu0 0.0
  %877 = vmatprep.subr.mxu0 0.0
  %878 = vmatpush1.msra.mxu0 0.0
  %879 = vmatprep.subr.mxu0 0.0
  %880 = vmatpush1.msra.mxu0 0.0
  %881 = vmatprep.subr.mxu0 0.0
  %882 = vmatpush1.msra.mxu0 0.0
  %883 = vmatprep.subr.mxu0 0.0
  %884 = vmatpush1.msra.mxu0 0.0
  %885 = vmatprep.mubr.f32.mxu0 0.0
  %886 = vmatmul.mubr.f32.gmra.mrb[0].mxu0 %v819
  %v887 = vpop.f32.mrb[0].mxu0
  %v888 = vadd.f32 0.0, %v887
  %v889 = vpop.f32.mrb[0].mxu0
  %890 = vdwg.mxu0
  %v891 = vadd.f32 %v151, %v888
  %v892 = vxor.u32 %v891, 2147483648
  %v893 = vmul.f32 %v892, 1.442695
  %v894 = vpow.pop %v893
  %v895 = vadd.f32 %v894, 1.0
  %v896 = vrcp.pop %v895
  %v897 = vmul.f32 1.0, %v896
  %v898 = vtanh.pop %v891
  %v899 = vmul.f32 %v897, %v696
  %901 = vrot.lane.b32.xlu0 %v898, 112
  %v902 = vpop.permute.xlu0 %901
  %v904 = vmul.f32 %v897, %v902
  %906 = vrot.lane.b32.xlu0 %v904, 8
  %v907 = vpop.permute.xlu0 %906
  %v909 = vadd.f32 %v899, %v907
  %v910 = vtanh.pop %v909
  %912 = vrot.lane.b32.xlu0 %v910, 16
  %v913 = vpop.permute.xlu0 %912
  %v915 = vmul.f32 %v897, %v913
  %918 = vrot.lane.b32.xlu0 %v805, 112
  %v919 = vpop.permute.xlu0 %918
  %v921 = vsel %vm48, %v818, %v919
  %v923 = vsel %vm495, %v921, 0
  %925 = vmatprep.subr.mxu0 0.0
  %926 = vmatpush1.msra.mxu0 %v32
  %927 = vmatprep.subr.mxu0 0.0
  %928 = vmatpush1.msra.mxu0 %v33
  %929 = vmatprep.subr.mxu0 0.0
  %930 = vmatpush1.msra.mxu0 0.0
  %931 = vmatprep.subr.mxu0 0.0
  %932 = vmatpush1.msra.mxu0 0.0
  %933 = vmatprep.subr.mxu0 0.0
  %934 = vmatpush1.msra.mxu0 0.0
  %935 = vmatprep.subr.mxu0 0.0
  %936 = vmatpush1.msra.mxu0 0.0
  %937 = vmatprep.subr.mxu0 0.0
  %938 = vmatpush1.msra.mxu0 0.0
  %939 = vmatprep.subr.mxu0 0.0
  %940 = vmatpush1.msra.mxu0 0.0
  %941 = vmatprep.subr.mxu0 0.0
  %942 = vmatpush1.msra.mxu0 0.0
  %943 = vmatprep.subr.mxu0 0.0
  %944 = vmatpush1.msra.mxu0 0.0
  %945 = vmatprep.subr.mxu0 0.0
  %946 = vmatpush1.msra.mxu0 0.0
  %947 = vmatprep.subr.mxu0 0.0
  %948 = vmatpush1.msra.mxu0 0.0
  %949 = vmatprep.subr.mxu0 0.0
  %950 = vmatpush1.msra.mxu0 0.0
  %951 = vmatprep.subr.mxu0 0.0
  %952 = vmatpush1.msra.mxu0 0.0
  %953 = vmatprep.subr.mxu0 0.0
  %954 = vmatpush1.msra.mxu0 0.0
  %955 = vmatprep.subr.mxu0 0.0
  %956 = vmatpush1.msra.mxu0 0.0
  %957 = vmatprep.subr.mxu0 0.0
  %958 = vmatpush1.msra.mxu0 0.0
  %959 = vmatprep.subr.mxu0 0.0
  %960 = vmatpush1.msra.mxu0 0.0
  %961 = vmatprep.subr.mxu0 0.0
  %962 = vmatpush1.msra.mxu0 0.0
  %963 = vmatprep.subr.mxu0 0.0
  %964 = vmatpush1.msra.mxu0 0.0
  %965 = vmatprep.subr.mxu0 0.0
  %966 = vmatpush1.msra.mxu0 0.0
  %967 = vmatprep.subr.mxu0 0.0
  %968 = vmatpush1.msra.mxu0 0.0
  %969 = vmatprep.subr.mxu0 0.0
  %970 = vmatpush1.msra.mxu0 0.0
  %971 = vmatprep.subr.mxu0 0.0
  %972 = vmatpush1.msra.mxu0 0.0
  %973 = vmatprep.subr.mxu0 0.0
  %974 = vmatpush1.msra.mxu0 0.0
  %975 = vmatprep.subr.mxu0 0.0
  %976 = vmatpush1.msra.mxu0 0.0
  %977 = vmatprep.subr.mxu0 0.0
  %978 = vmatpush1.msra.mxu0 0.0
  %979 = vmatprep.subr.mxu0 0.0
  %980 = vmatpush1.msra.mxu0 0.0
  %981 = vmatprep.subr.mxu0 0.0
  %982 = vmatpush1.msra.mxu0 0.0
  %983 = vmatprep.subr.mxu0 0.0
  %984 = vmatpush1.msra.mxu0 0.0
  %985 = vmatprep.subr.mxu0 0.0
  %986 = vmatpush1.msra.mxu0 0.0
  %987 = vmatprep.subr.mxu0 0.0
  %988 = vmatpush1.msra.mxu0 0.0
  %989 = vmatprep.mubr.f32.mxu0 0.0
  %990 = vmatmul.mubr.f32.gmra.mrb[0].mxu0 %v923
  %v991 = vpop.f32.mrb[0].mxu0
  %v992 = vadd.f32 %v159, %v991
  %v993 = vpop.f32.mrb[0].mxu0
  %994 = vdwg.mxu0
  %v995 = vxor.u32 %v992, 2147483648
  %v996 = vmul.f32 %v995, 1.442695
  %v997 = vpow.pop %v996
  %v998 = vadd.f32 %v997, 1.0
  %v999 = vrcp.pop %v998
  %v1000 = vmul.f32 1.0, %v999
  %v1001 = vtanh.pop %v992
  %v1002 = vmul.f32 %v1000, %v799
  %1004 = vrot.lane.b32.xlu0 %v1001, 112
  %v1005 = vpop.permute.xlu0 %1004
  %v1007 = vmul.f32 %v1000, %v1005
  %1009 = vrot.lane.b32.xlu0 %v1007, 8
  %v1010 = vpop.permute.xlu0 %1009
  %v1012 = vadd.f32 %v1002, %v1010
  %v1013 = vtanh.pop %v1012
  %1015 = vrot.lane.b32.xlu0 %v1013, 16
  %v1016 = vpop.permute.xlu0 %1015
  %v1018 = vmul.f32 %v1000, %v1016
  %v1019 = vlaneseq
  %v1020 = vshrl.u32 %v1019, 7
  %v1021 = vsub.s32 3, %v1020
  %v1022 = vrot.slane %v34, %v1021
  %1024 = vrot.lane.b32.xlu0 %v1022, 24
  %v1025 = vpop.permute.xlu0 %1024
  %v1027 = vmul.f32 %v1018, %v1025
  %v1028 = vadd.f32 %v815, %v1027
  %1030 = vrot.lane.b32.xlu0 %v915, 104
  %v1031 = vpop.permute.xlu0 %1030
  %1034 = vrot.lane.b32.xlu0 %v1018, 112
  %v1035 = vpop.permute.xlu0 %1034
  %v1037 = vsel %vm48, %v1031, %v1035
  %v1039 = vsel %vm495, %v1037, 0
  %1041 = vmatprep.subr.mxu0 0.0
  %1042 = vmatpush1.msra.mxu0 %v32
  %1043 = vmatprep.subr.mxu0 0.0
  %1044 = vmatpush1.msra.mxu0 %v33
  %1045 = vmatprep.subr.mxu0 0.0
  %1046 = vmatpush1.msra.mxu0 0.0
  %1047 = vmatprep.subr.mxu0 0.0
  %1048 = vmatpush1.msra.mxu0 0.0
  %1049 = vmatprep.subr.mxu0 0.0
  %1050 = vmatpush1.msra.mxu0 0.0
  %1051 = vmatprep.subr.mxu0 0.0
  %1052 = vmatpush1.msra.mxu0 0.0
  %1053 = vmatprep.subr.mxu0 0.0
  %1054 = vmatpush1.msra.mxu0 0.0
  %1055 = vmatprep.subr.mxu0 0.0
  %1056 = vmatpush1.msra.mxu0 0.0
  %1057 = vmatprep.subr.mxu0 0.0
  %1058 = vmatpush1.msra.mxu0 0.0
  %1059 = vmatprep.subr.mxu0 0.0
  %1060 = vmatpush1.msra.mxu0 0.0
  %1061 = vmatprep.subr.mxu0 0.0
  %1062 = vmatpush1.msra.mxu0 0.0
  %1063 = vmatprep.subr.mxu0 0.0
  %1064 = vmatpush1.msra.mxu0 0.0
  %1065 = vmatprep.subr.mxu0 0.0
  %1066 = vmatpush1.msra.mxu0 0.0
  %1067 = vmatprep.subr.mxu0 0.0
  %1068 = vmatpush1.msra.mxu0 0.0
  %1069 = vmatprep.subr.mxu0 0.0
  %1070 = vmatpush1.msra.mxu0 0.0
  %1071 = vmatprep.subr.mxu0 0.0
  %1072 = vmatpush1.msra.mxu0 0.0
  %1073 = vmatprep.subr.mxu0 0.0
  %1074 = vmatpush1.msra.mxu0 0.0
  %1075 = vmatprep.subr.mxu0 0.0
  %1076 = vmatpush1.msra.mxu0 0.0
  %1077 = vmatprep.subr.mxu0 0.0
  %1078 = vmatpush1.msra.mxu0 0.0
  %1079 = vmatprep.subr.mxu0 0.0
  %1080 = vmatpush1.msra.mxu0 0.0
  %1081 = vmatprep.subr.mxu0 0.0
  %1082 = vmatpush1.msra.mxu0 0.0
  %1083 = vmatprep.subr.mxu0 0.0
  %1084 = vmatpush1.msra.mxu0 0.0
  %1085 = vmatprep.subr.mxu0 0.0
  %1086 = vmatpush1.msra.mxu0 0.0
  %1087 = vmatprep.subr.mxu0 0.0
  %1088 = vmatpush1.msra.mxu0 0.0
  %1089 = vmatprep.subr.mxu0 0.0
  %1090 = vmatpush1.msra.mxu0 0.0
  %1091 = vmatprep.subr.mxu0 0.0
  %1092 = vmatpush1.msra.mxu0 0.0
  %1093 = vmatprep.subr.mxu0 0.0
  %1094 = vmatpush1.msra.mxu0 0.0
  %1095 = vmatprep.subr.mxu0 0.0
  %1096 = vmatpush1.msra.mxu0 0.0
  %1097 = vmatprep.subr.mxu0 0.0
  %1098 = vmatpush1.msra.mxu0 0.0
  %1099 = vmatprep.subr.mxu0 0.0
  %1100 = vmatpush1.msra.mxu0 0.0
  %1101 = vmatprep.subr.mxu0 0.0
  %1102 = vmatpush1.msra.mxu0 0.0
  %1103 = vmatprep.subr.mxu0 0.0
  %1104 = vmatpush1.msra.mxu0 0.0
  %1105 = vmatprep.mubr.f32.mxu0 0.0
  %1106 = vmatmul.mubr.f32.gmra.mrb[0].mxu0 %v1039
  %v1107 = vpop.f32.mrb[0].mxu0
  %v1108 = vadd.f32 %v159, %v1107
  %v1109 = vpop.f32.mrb[0].mxu0
  %1110 = vdwg.mxu0
  %v1111 = vxor.u32 %v1108, 2147483648
  %v1112 = vmul.f32 %v1111, 1.442695
  %v1113 = vpow.pop %v1112
  %v1114 = vadd.f32 %v1113, 1.0
  %v1115 = vrcp.pop %v1114
  %v1116 = vmul.f32 1.0, %v1115
  %v1117 = vtanh.pop %v1108
  %v1118 = vmul.f32 %v1116, %v1012
  %1120 = vrot.lane.b32.xlu0 %v1117, 112
  %v1121 = vpop.permute.xlu0 %1120
  %v1123 = vmul.f32 %v1116, %v1121
  %1125 = vrot.lane.b32.xlu0 %v1123, 8
  %v1126 = vpop.permute.xlu0 %1125
  %v1128 = vadd.f32 %v1118, %v1126
  %v1129 = vtanh.pop %v1128
  %1131 = vrot.lane.b32.xlu0 %v1129, 16
  %v1132 = vpop.permute.xlu0 %1131
  %v1134 = vmul.f32 %v1116, %v1132
  %v1135 = vlaneseq
  %v1136 = vshrl.u32 %v1135, 7
  %v1137 = vsub.s32 4, %v1136
  %v1138 = vrot.slane %v34, %v1137
  %1140 = vrot.lane.b32.xlu0 %v1138, 24
  %v1141 = vpop.permute.xlu0 %1140
  %v1143 = vmul.f32 %v1134, %v1141
  %v1144 = vadd.f32 %v1028, %v1143
  %1146 = vrot.lane.b32.xlu0 %v1144, 104
  %v1147 = vpop.permute.xlu0 %1146
  %vm1149 = vcmask 60416
  %v1150 = vsel %vm1149, %v1147, 0.0
  %1151 = vadd.xlane.f32.xlu0 %v1150
  %v1152 = vpop.xlane.xlu0 %1151
  %v1153 = vld [vmem:[#allocation2] sm:$0x1]
  %v1155 = vlaneseq
  %v1156 = vshrl.u32 %v1155, 7
  %v1157 = vsub.s32 0, %v1156
  %v1158 = vrot.slane %v1153, %v1157
  %v1160 = vadd.f32 %v1152, %v1158
  %vm1161 = vcmask 3072
  %1162 = vst.msk [vmem:[%s8] sm:$0xf] %vm1161, %v1160
  // Predicated region
  $region34: #{tpu_custom_call.1} parent=0 // pred_check
    _
  $region35: #{tpu_custom_call.1} parent=0 // pred_check_branch
    %1164 = sbr.rel (0) target = $region37
  $region36: #{tpu_custom_call.1} parent=0 // pred_region
    _
  $region37: #{tpu_custom_call.1} parent=0 // pred_fallthru
    _
  // Predicated region
  $region38: #{tpu_custom_call.1} parent=0 // pred_check
    _
  $region39: #{tpu_custom_call.1} parent=0 // pred_check_branch
    %1166 = sbr.rel (0) target = $region41
  $region40: #{tpu_custom_call.1} parent=0 // pred_region
    _
  $region41: #{tpu_custom_call.1} parent=0 // pred_fallthru
    _

</llo_original>
